<compile_context>
chip_gen: v7x
topology: tpu7x:2x2x1
jax: 0.10.0
libtpu: 0.0.40
codegen_flags: <defaults>
</compile_context>

<pallas_src>
import functools

import jax
import jax.numpy as jnp
from jax import lax
from jax.experimental import pallas as pl
from jax.experimental.pallas import tpu as pltpu


def _num_tensorcores_per_chip():
    """Best-effort detection of TensorCores per chip (split only helps >1)."""
    try:
        kind = jax.devices()[0].device_kind.lower()
    except Exception:
        return 1
    if any(tag in kind for tag in ("v5e", "v5 lite", "v5lite", "v6")):
        return 1
    if any(tag in kind for tag in ("v7", "v4", "v5p")):
        return 2
    return 1


def _dice_kernel(x_ref, t_ref, out_ref, acc_prod, acc_sum, *,
                 rows_per_block, lanes, chunk_rows, acc_rows,
                 blocks_per_split, total_rows, ragged):
    s = pl.program_id(0)   # TensorCore split (parallel)
    i = pl.program_id(1)   # reduction over blocks (arbitrary)

    @pl.when(i == 0)
    def _():
        acc_prod[...] = jnp.zeros_like(acc_prod)
        acc_sum[...] = jnp.zeros_like(acc_sum)

    n_chunks = rows_per_block // chunk_rows
    cgroups = chunk_rows // acc_rows
    block_row0 = (s * blocks_per_split + i) * rows_per_block

    def _accum(xc, tc):
        # VPU-only partial sums into a small accumulator. The regroup to
        # (cgroups, acc_rows, lanes) keeps acc_rows/8 independent add chains
        # so the 4 VALU slots stay busy; cross-lane reduce happens in JAX.
        acc_prod[...] += jnp.sum((xc * tc).reshape(cgroups, acc_rows, lanes),
                                 axis=0)
        acc_sum[...] += jnp.sum((xc + tc).reshape(cgroups, acc_rows, lanes),
                                axis=0)

    @pl.loop(0, n_chunks)
    def _(c):
        r0 = pl.multiple_of(c * chunk_rows, chunk_rows)
        xc = x_ref[pl.ds(r0, chunk_rows), :].astype(jnp.float32)
        tc = t_ref[pl.ds(r0, chunk_rows), :].astype(jnp.float32)
        if not ragged:
            _accum(xc, tc)
        else:
            # Only the chunk(s) extending past the real data pay for the mask.
            chunk_row0 = block_row0 + r0
            needs_mask = chunk_row0 + chunk_rows > total_rows

            @pl.when(needs_mask)
            def _():
                row = chunk_row0 + lax.broadcasted_iota(
                    jnp.int32, (chunk_rows, lanes), 0)
                valid = row < total_rows
                _accum(jnp.where(valid, xc, 0.0), jnp.where(valid, tc, 0.0))

            @pl.when(jnp.logical_not(needs_mask))
            def _():
                _accum(xc, tc)

    @pl.when(i == pl.num_programs(1) - 1)
    def _():
        out_ref[0, 0] = acc_prod[...]
        out_ref[0, 1] = acc_sum[...]


def dice_loss(inputs, targets, smooth=1.0, *, rows_per_block=None, lanes=128,
              num_splits=None):
    """Pallas implementation of DiceLoss.forward (returns scalar float32)."""
    x = inputs.reshape(-1)
    t = targets.reshape(-1)
    n = x.shape[0]
    assert t.shape[0] == n, "inputs and targets must have the same #elements"

    # ---- non-lane-aligned tail (< 128 elems): fold into the JAX epilogue ---
    n_main = (n // lanes) * lanes
    tail_inter = jnp.float32(0.0)
    tail_sum = jnp.float32(0.0)
    if n_main < n:
        xt = x[n_main:].astype(jnp.float32)
        tt = t[n_main:].astype(jnp.float32)
        tail_inter = jnp.sum(xt * tt)
        tail_sum = jnp.sum(xt) + jnp.sum(tt)

    smooth = jnp.float32(smooth)

    if n_main == 0:
        # Degenerate tiny input (< 128 elements): not worth a kernel launch.
        dice = (2.0 * tail_inter + smooth) / (tail_sum + smooth)
        return jnp.float32(1.0) - dice

    if n_main < n:
        x = x[:n_main]
        t = t[:n_main]
    total_rows = n_main // lanes
    x = x.reshape(total_rows, lanes)     # zero-copy reshape on the aligned path
    t = t.reshape(total_rows, lanes)

    itemsize = max(int(inputs.dtype.itemsize), int(targets.dtype.itemsize))

    # ---- tile selection -----------------------------------------------------
    if rows_per_block is None:
        # ~4 MiB per input block for the widest dtype: amortizes the ~0.35 us
        # per-grid-step overhead to a few percent on v5e/v6e/v7x.
        rows_per_block = 8192 * max(1, 4 // itemsize)
    if total_rows < 8:
        rows_per_block = total_rows              # full-extent block (< 8 rows)
    else:
        rows_per_block = max(8, (int(rows_per_block) // 8) * 8)
        rows_per_block = min(rows_per_block, (total_rows // 8) * 8)
    n_blocks = pl.cdiv(total_rows, rows_per_block)

    # ---- split across TensorCores only where a second core exists ----------
    if num_splits is None:
        num_splits = _num_tensorcores_per_chip()
    num_splits = max(1, min(int(num_splits), n_blocks))
    if num_splits > 1 and n_blocks % num_splits != 0:
        # Re-shape the tiling so num_splits * blocks_per_split == n_blocks and
        # every block starts inside the array: no phantom blocks, no clamped
        # index_map, no redundant HBM reads.
        nb = ((n_blocks + num_splits - 1) // num_splits) * num_splits
        rpb = max(8, ((pl.cdiv(total_rows, nb) + 7) // 8) * 8)
        if (nb - 1) * rpb < total_rows:
            rows_per_block, n_blocks = rpb, nb
        else:
            num_splits = 1        # array too small for a clean multi-core split
    blocks_per_split = n_blocks // num_splits
    ragged = (n_blocks * rows_per_block) != total_rows

    # ---- inner chunking: bounds in-kernel temporaries for any block size ---
    chunk_rows = rows_per_block
    for c in (512, 256, 128, 64, 32, 16, 8):
        if rows_per_block % c == 0:
            chunk_rows = c
            break
    if chunk_rows % 32 == 0:
        acc_rows = 32             # 4 independent (8,128) accumulator vregs
    elif chunk_rows % 8 == 0:
        acc_rows = 8
    else:
        acc_rows = chunk_rows     # tiny full-extent case (< 8 rows)

    # Explicit VMEM budget: 2 inputs x 2 pipeline buffers x block + headroom.
    # >= 16 MiB covers v5e's scoped default; <= 48 MiB fits v7x's 64 MiB VMEM.
    block_bytes = rows_per_block * lanes * itemsize
    vmem_limit = int(min(max(6 * block_bytes + (4 << 20), 16 << 20), 48 << 20))

    kernel = functools.partial(
        _dice_kernel,
        rows_per_block=rows_per_block, lanes=lanes, chunk_rows=chunk_rows,
        acc_rows=acc_rows, blocks_per_split=blocks_per_split,
        total_rows=total_rows, ragged=ragged)

    in_index_map = lambda s, i: (s * blocks_per_split + i, 0)

    partials = pl.pallas_call(
        kernel,
        out_shape=jax.ShapeDtypeStruct((num_splits, 2, acc_rows, lanes),
                                       jnp.float32),
        grid_spec=pltpu.PrefetchScalarGridSpec(
            num_scalar_prefetch=0,
            grid=(num_splits, blocks_per_split),
            in_specs=[
                pl.BlockSpec((rows_per_block, lanes), in_index_map),
                pl.BlockSpec((rows_per_block, lanes), in_index_map),
            ],
            out_specs=pl.BlockSpec((1, 2, acc_rows, lanes),
                                   lambda s, i: (s, 0, 0, 0)),
            scratch_shapes=[pltpu.VMEM((acc_rows, lanes), jnp.float32),
                            pltpu.VMEM((acc_rows, lanes), jnp.float32)],
        ),
        compiler_params=pltpu.CompilerParams(
            dimension_semantics=("parallel", "arbitrary"),
            vmem_limit_bytes=vmem_limit,
        ),
        cost_estimate=pl.CostEstimate(
            flops=3 * n_main,
            transcendentals=0,
            bytes_accessed=int(
                n_main * (inputs.dtype.itemsize + targets.dtype.itemsize)
                + num_splits * 2 * acc_rows * lanes * 4),
        ),
    )(x, t)

    # Tiny epilogue in JAX: combine per-split partials, tail, dice formula.
    intersection = jnp.sum(partials[:, 0]) + tail_inter
    sum_xt = jnp.sum(partials[:, 1]) + tail_sum
    dice = (2.0 * intersection + smooth) / (sum_xt + smooth)
    return jnp.float32(1.0) - dice


def _ref_dice(inputs, targets, smooth=1.0):
    xf = inputs.reshape(-1).astype(jnp.float32)
    tf = targets.reshape(-1).astype(jnp.float32)
    inter = jnp.sum(xf * tf)
    return 1.0 - (2.0 * inter + smooth) / (jnp.sum(xf) + jnp.sum(tf) + smooth)


if __name__ == "__main__":
    key = jax.random.PRNGKey(0)

    def make(shape, k):
        k1, k2 = jax.random.split(k)
        inp = jax.nn.sigmoid(jax.random.normal(k1, shape, jnp.float32))
        tgt = (jax.random.uniform(k2, shape) > 0.5).astype(jnp.float32)
        return inp, tgt

    # Case 1: NCHW (2,4,16,16) — lane-aligned, single block, no masking.
    key, sub = jax.random.split(key)
    inp1, tgt1 = make((2, 4, 16, 16), sub)
    loss1 = jax.block_until_ready(dice_loss(inp1, tgt1, smooth=1.0))
    assert jnp.allclose(loss1, _ref_dice(inp1, tgt1), atol=1e-5, rtol=1e-5), loss1

    # Case 2: (2,3,16,16) — ragged row count: per-chunk gated mask.
    key, sub = jax.random.split(key)
    inp2, tgt2 = make((2, 3, 16, 16), sub)
    loss2 = jax.block_until_ready(dice_loss(inp2, tgt2, smooth=1.0))
    assert jnp.allclose(loss2, _ref_dice(inp2, tgt2), atol=1e-5, rtol=1e-5), loss2

    # Case 3: (5,5,7) — not lane-aligned: kernel on prefix + tail in epilogue.
    key, sub = jax.random.split(key)
    inp3, tgt3 = make((5, 5, 7), sub)
    loss3 = jax.block_until_ready(dice_loss(inp3, tgt3, smooth=1.0))
    assert jnp.allclose(loss3, _ref_dice(inp3, tgt3), atol=1e-5, rtol=1e-5), loss3

    # Case 4: small forced tile + forced 2-way split request (falls back to a
    # clean tiling with no phantom blocks).
    key, sub = jax.random.split(key)
    inp4, tgt4 = make((2, 3, 16, 32), sub)
    loss4 = jax.block_until_ready(
        dice_loss(inp4, tgt4, smooth=1.0, rows_per_block=8, num_splits=2))
    assert jnp.allclose(loss4, _ref_dice(inp4, tgt4), atol=1e-5, rtol=1e-5), loss4

    print("KERNEL_OK")
</pallas_src>

<mosaic_0001>
module attributes {stable_mosaic.version = 11 : i64} {
  func.func @_dice_kernel(%arg0: i32, %arg1: i32, %arg2: memref<16x128xf32, #tpu.memory_space<vmem>>, %arg3: memref<16x128xf32, #tpu.memory_space<vmem>>, %arg4: memref<1x2x8x128xf32, #tpu.memory_space<vmem>>, %arg5: memref<8x128xf32, #tpu.memory_space<vmem>>, %arg6: memref<8x128xf32, #tpu.memory_space<vmem>>) attributes {dimension_semantics = [#tpu.dimension_semantics<parallel>, #tpu.dimension_semantics<arbitrary>], iteration_bounds = array<i64: 1, 1>, scalar_prefetch = 0 : i64, scratch_operands = 2 : i64, tpu.core_type = #tpu.core_type<tc>, window_params = [{transform_indices = @transform_0, window_bounds = array<i64: 16, 128>}, {transform_indices = @transform_1, window_bounds = array<i64: 16, 128>}, {transform_indices = @transform_2, window_bounds = array<i64: 1, 2, 8, 128>}]} {
    %c0_i32 = arith.constant 0 : i32
    %0 = arith.cmpi eq, %arg1, %c0_i32 : i32
    %1 = arith.extui %0 : i1 to i32
    %c0_i32_0 = arith.constant 0 : i32
    %2 = arith.cmpi ne, %1, %c0_i32_0 : i32
    scf.if %2 {
      %cst_16 = arith.constant 0.000000e+00 : f32
      %26 = vector.broadcast %cst_16 : f32 to vector<8x128xf32>
      %c0_17 = arith.constant 0 : index
      %c0_18 = arith.constant 0 : index
      %27 = vector.load %arg5[%c0_17, %c0_18] : memref<8x128xf32, #tpu.memory_space<vmem>>, vector<8x128xf32>
      tpu.vector_store %arg5[%c0_17, %c0_18], %26 {strides = array<i32>} : memref<8x128xf32, #tpu.memory_space<vmem>>, vector<8x128xf32>,
      %cst_19 = arith.constant 0.000000e+00 : f32
      %28 = vector.broadcast %cst_19 : f32 to vector<8x128xf32>
      %c0_20 = arith.constant 0 : index
      %c0_21 = arith.constant 0 : index
      %29 = vector.load %arg6[%c0_20, %c0_21] : memref<8x128xf32, #tpu.memory_space<vmem>>, vector<8x128xf32>
      tpu.vector_store %arg6[%c0_20, %c0_21], %28 {strides = array<i32>} : memref<8x128xf32, #tpu.memory_space<vmem>>, vector<8x128xf32>,
    } else {
    }
    %c0_i32_1 = arith.constant 0 : i32
    %c1_i32 = arith.constant 1 : i32
    %3 = arith.muli %c0_i32_1, %c1_i32 : i32
    %c0_i32_2 = arith.constant 0 : i32
    %4 = arith.addi %c0_i32_2, %3 : i32
    %c16_i32 = arith.constant 16 : i32
    %5 = arith.muli %4, %c16_i32 : i32
    %6 = tpu.assume_multiple %5, 16 : i32
    %7 = arith.index_cast %6 : i32 to index
    %c0 = arith.constant 0 : index
    %8 = vector.load %arg2[%7, %c0] : memref<16x128xf32, #tpu.memory_space<vmem>>, vector<16x128xf32>
    %9 = arith.index_cast %6 : i32 to index
    %c0_3 = arith.constant 0 : index
    %10 = vector.load %arg3[%9, %c0_3] : memref<16x128xf32, #tpu.memory_space<vmem>>, vector<16x128xf32>
    %c0_4 = arith.constant 0 : index
    %c0_5 = arith.constant 0 : index
    %11 = vector.load %arg5[%c0_4, %c0_5] : memref<8x128xf32, #tpu.memory_space<vmem>>, vector<8x128xf32>
    %12 = arith.mulf %8, %10 : vector<16x128xf32>
    %13 = vector.shape_cast %12 : vector<16x128xf32> to vector<2x8x128xf32>
    %cst = arith.constant dense<0.000000e+00> : vector<8x128xf32>
    %14 = vector.multi_reduction <add>, %13, %cst [0] : vector<2x8x128xf32> to vector<8x128xf32>
    %15 = arith.addf %11, %14 : vector<8x128xf32>
    %c0_6 = arith.constant 0 : index
    %c0_7 = arith.constant 0 : index
    %16 = vector.load %arg5[%c0_6, %c0_7] : memref<8x128xf32, #tpu.memory_space<vmem>>, vector<8x128xf32>
    tpu.vector_store %arg5[%c0_6, %c0_7], %15 {strides = array<i32>} : memref<8x128xf32, #tpu.memory_space<vmem>>, vector<8x128xf32>,
    %c0_8 = arith.constant 0 : index
    %c0_9 = arith.constant 0 : index
    %17 = vector.load %arg6[%c0_8, %c0_9] : memref<8x128xf32, #tpu.memory_space<vmem>>, vector<8x128xf32>
    %18 = arith.addf %8, %10 : vector<16x128xf32>
    %19 = vector.shape_cast %18 : vector<16x128xf32> to vector<2x8x128xf32>
    %cst_10 = arith.constant dense<0.000000e+00> : vector<8x128xf32>
    %20 = vector.multi_reduction <add>, %19, %cst_10 [0] : vector<2x8x128xf32> to vector<8x128xf32>
    %21 = arith.addf %17, %20 : vector<8x128xf32>
    %c0_11 = arith.constant 0 : index
    %c0_12 = arith.constant 0 : index
    %22 = vector.load %arg6[%c0_11, %c0_12] : memref<8x128xf32, #tpu.memory_space<vmem>>, vector<8x128xf32>
    tpu.vector_store %arg6[%c0_11, %c0_12], %21 {strides = array<i32>} : memref<8x128xf32, #tpu.memory_space<vmem>>, vector<8x128xf32>,
    %c1_i32_13 = arith.constant 1 : i32
    %c0_i32_14 = arith.constant 0 : i32
    %23 = arith.cmpi eq, %arg1, %c0_i32_14 : i32
    %24 = arith.extui %23 : i1 to i32
    %c0_i32_15 = arith.constant 0 : i32
    %25 = arith.cmpi ne, %24, %c0_i32_15 : i32
    scf.if %25 {
      %c0_16 = arith.constant 0 : index
      %c0_17 = arith.constant 0 : index
      %26 = vector.load %arg5[%c0_16, %c0_17] : memref<8x128xf32, #tpu.memory_space<vmem>>, vector<8x128xf32>
      %c0_18 = arith.constant 0 : index
      %c0_19 = arith.constant 0 : index
      %c0_20 = arith.constant 0 : index
      %c0_21 = arith.constant 0 : index
      %27 = vector.load %arg4[%c0_18, %c0_19, %c0_20, %c0_21] : memref<1x2x8x128xf32, #tpu.memory_space<vmem>>, vector<1x1x8x128xf32>
      %28 = vector.shape_cast %27 : vector<1x1x8x128xf32> to vector<8x128xf32>
      %29 = vector.shape_cast %26 : vector<8x128xf32> to vector<1x1x8x128xf32>
      tpu.vector_store %arg4[%c0_18, %c0_19, %c0_20, %c0_21], %29 {strides = array<i32>} : memref<1x2x8x128xf32, #tpu.memory_space<vmem>>, vector<1x1x8x128xf32>,
      %c0_22 = arith.constant 0 : index
      %c0_23 = arith.constant 0 : index
      %30 = vector.load %arg6[%c0_22, %c0_23] : memref<8x128xf32, #tpu.memory_space<vmem>>, vector<8x128xf32>
      %c0_24 = arith.constant 0 : index
      %c1 = arith.constant 1 : index
      %c0_25 = arith.constant 0 : index
      %c0_26 = arith.constant 0 : index
      %31 = vector.load %arg4[%c0_24, %c1, %c0_25, %c0_26] : memref<1x2x8x128xf32, #tpu.memory_space<vmem>>, vector<1x1x8x128xf32>
      %32 = vector.shape_cast %31 : vector<1x1x8x128xf32> to vector<8x128xf32>
      %33 = vector.shape_cast %30 : vector<8x128xf32> to vector<1x1x8x128xf32>
      tpu.vector_store %arg4[%c0_24, %c1, %c0_25, %c0_26], %33 {strides = array<i32>} : memref<1x2x8x128xf32, #tpu.memory_space<vmem>>, vector<1x1x8x128xf32>,
    } else {
    }
    return
  }
  func.func @transform_0(%arg0: i32, %arg1: i32) -> (i32, i32) {
    %c1_i32 = arith.constant 1 : i32
    %0 = arith.muli %arg0, %c1_i32 : i32
    %1 = arith.addi %0, %arg1 : i32
    %c0_i32 = arith.constant 0 : i32
    %c0_i32_0 = arith.constant 0 : i32
    return %1, %c0_i32 : i32, i32
  }
  func.func @transform_1(%arg0: i32, %arg1: i32) -> (i32, i32) {
    %c1_i32 = arith.constant 1 : i32
    %0 = arith.muli %arg0, %c1_i32 : i32
    %1 = arith.addi %0, %arg1 : i32
    %c0_i32 = arith.constant 0 : i32
    %c0_i32_0 = arith.constant 0 : i32
    return %1, %c0_i32 : i32, i32
  }
  func.func @transform_2(%arg0: i32, %arg1: i32) -> (i32, i32, i32, i32) {
    %c0_i32 = arith.constant 0 : i32
    %c0_i32_0 = arith.constant 0 : i32
    %c0_i32_1 = arith.constant 0 : i32
    %c0_i32_2 = arith.constant 0 : i32
    return %arg0, %c0_i32, %c0_i32_0, %c0_i32_1 : i32, i32, i32, i32
  }
}

</mosaic_0001>

<llo_original>
// kernel: tpu_custom_call.1
$region0: #{tpu_custom_call.1}
  #allocation0 [shape = 'u32[]', space=smem, size = 0x4, offset = 0x4, fixed_abs, tag = 'smem constant byte address 0x4 - core index']
  #allocation1 [shape = 'u32[144,128]{1,0:T(1,128)}', space=vmem, size = 0x12000, scoped, tag = 'internal scratch']
  #allocation2 [shape = 'f32[8,128]{1,0:T(8,128)}', space=vmem, size = 0x1000, scoped, tag = 'scratch operand']
  #allocation3 [shape = 'f32[8,128]{1,0:T(8,128)}', space=vmem, size = 0x1000, scoped, tag = 'scratch operand']
  %s0 = inlined_call_operand.hbm [shape: f32[16,128], index: 0, kind: input, shape index: {}]
  %s1 = inlined_call_operand.hbm [shape: f32[16,128], index: 1, kind: input, shape index: {}]
  %s2 = inlined_call_operand.hbm [shape: f32[1,2,8,128], index: 2, kind: output, shape index: {}]
  %s3 = sld [smem:[#allocation0]]
  $region34: #{tpu_custom_call.1} parent=0
    _
  %s5 = ssub.s32 1, %s3
  %s6 = scalar_select 0, %s5, %s3
  $region1: #{tpu_custom_call.1} parent=0
    #allocation4 [shape = 'u8[8192]{0}', space=vmem, size = 0x2000, scoped, tag = 'input window, operand 0, single buffered']
    #allocation5 [shape = 's32[1]{0}', space=sflag, size = 0x4, scoped, tag = 'scoped memory for tpu_custom_call.1']
    #allocation6 [shape = 's32[1]{0}', space=sflag, size = 0x4, scoped, tag = 'scoped memory for tpu_custom_call.1']
    #allocation7 [shape = 'u8[8192]{0}', space=vmem, size = 0x2000, scoped, tag = 'input window, operand 1, single buffered']
    #allocation8 [shape = 's32[1]{0}', space=sflag, size = 0x4, scoped, tag = 'scoped memory for tpu_custom_call.1']
    #allocation9 [shape = 'u8[8192]{0}', space=vmem, size = 0x2000, scoped, tag = 'output window, operand 0, single buffered']
    %7 = vsyncpa [#allocation5], 0
    %8 = vsyncpa [#allocation8], 0
    %9 = vsyncpa [#allocation6], 0
    // Predicated region
    $region2: #{tpu_custom_call.1} parent=1 // pred_check
      _
    $region3: #{tpu_custom_call.1} parent=1 // pred_check_branch
      %11 = sbr.rel (0) target = $region5
    $region4: #{tpu_custom_call.1} parent=1 // pred_region
      %s12 = sadd.s32 0, 0
      %s13 = smul.u32 2, %s12
      %s15 = ssub.s32 256, 256
      %16 = vsyncadd [#allocation5], %s15
      %s17 = smul.addr %s13, 128
      %s18 = scalar_lea.hbm %s0, %s17
      %s19 = sshll.u32 [#allocation4], 4
      %s20 = int_to_ptr.vmem [resolvable:$true] %s19
      %25 = dma.hbm_to_vmem [thread:$0]  %s18, 256, %s20, [#allocation5], 128, 128, 8
    $region5: #{tpu_custom_call.1} parent=1 // pred_fallthru
      _
    // Predicated region
    $region6: #{tpu_custom_call.1} parent=1 // pred_check
      _
    $region7: #{tpu_custom_call.1} parent=1 // pred_check_branch
      %27 = sbr.rel (0) target = $region9
    $region8: #{tpu_custom_call.1} parent=1 // pred_region
      %s28 = sadd.s32 0, 0
      %s29 = smul.u32 2, %s28
      %s31 = ssub.s32 256, 256
      %32 = vsyncadd [#allocation8], %s31
      %s33 = smul.addr %s29, 128
      %s34 = scalar_lea.hbm %s1, %s33
      %s35 = sshll.u32 [#allocation7], 4
      %s36 = int_to_ptr.vmem [resolvable:$true] %s35
      %41 = dma.hbm_to_vmem [thread:$0]  %s34, 256, %s36, [#allocation8], 128, 128, 8
    $region9: #{tpu_custom_call.1} parent=1 // pred_fallthru
      _
    // Predicated region
    $region10: #{tpu_custom_call.1} parent=1 // pred_check
      _
    $region11: #{tpu_custom_call.1} parent=1 // pred_check_branch
      %43 = sbr.rel (0) target = $region13
    $region12: #{tpu_custom_call.1} parent=1 // pred_region
      %44 = dma.done [#allocation5], 256
    $region13: #{tpu_custom_call.1} parent=1 // pred_fallthru
      _
    // Predicated region
    $region14: #{tpu_custom_call.1} parent=1 // pred_check
      _
    $region15: #{tpu_custom_call.1} parent=1 // pred_check_branch
      %46 = sbr.rel (0) target = $region17
    $region16: #{tpu_custom_call.1} parent=1 // pred_region
      %47 = dma.done [#allocation8], 256
    $region17: #{tpu_custom_call.1} parent=1 // pred_fallthru
      _
    %s48 = sadd.s32 0, 0
    %s49 = smul.u32 2, %s48
    %s50 = sadd.s32 0, 0
    %s51 = smul.u32 2, %s50
    %p52 = scmp.eq.s32.totalorder 0, 0
    // Predicated region
    $region18: #{tpu_custom_call.1} parent=1 // pred_check
      %p53 = pneg %p52
    $region19: #{tpu_custom_call.1} parent=1 // pred_check_branch
      %55 = sbr.rel (%p53) target = $region21
    $region20: #{tpu_custom_call.1} parent=1 // pred_region
      %56 = vst [vmem:[#allocation2] sm:$0xff] 0.0
      %57 = vst [vmem:[#allocation3] sm:$0xff] 0.0
    $region21: #{tpu_custom_call.1} parent=1 // pred_fallthru
      _
    %v58 = vld [vmem:[#allocation4] sm:$0xff]
    %v59 = vld [vmem:[#allocation4 + $0x8] sm:$0xff]
    %v60 = vld [vmem:[#allocation7] sm:$0xff]
    %v61 = vld [vmem:[#allocation7 + $0x8] sm:$0xff]
    %v62 = vld [vmem:[#allocation2] sm:$0xff]
    %v63 = vmul.f32 %v58, %v60
    %v64 = vmul.f32 %v59, %v61
    %v65 = vadd.f32 %v63, %v64
    %v66 = vadd.f32 %v62, %v65
    %67 = vst [vmem:[#allocation2] sm:$0xff] %v66
    %v68 = vld [vmem:[#allocation3] sm:$0xff]
    %v69 = vadd.f32 %v58, %v60
    %v70 = vadd.f32 %v59, %v61
    %v71 = vadd.f32 %v69, %v70
    %v72 = vadd.f32 %v68, %v71
    %73 = vst [vmem:[#allocation3] sm:$0xff] %v72
    // Predicated region
    $region22: #{tpu_custom_call.1} parent=1 // pred_check
      %p74 = pneg %p52
    $region23: #{tpu_custom_call.1} parent=1 // pred_check_branch
      %76 = sbr.rel (%p74) target = $region25
    $region24: #{tpu_custom_call.1} parent=1 // pred_region
      %v77 = vld [vmem:[#allocation2] sm:$0xff]
      %78 = vst [vmem:[#allocation9] sm:$0xff] %v77
      %v79 = vld [vmem:[#allocation3] sm:$0xff]
      %s80 = scalar_lea.vmem [#allocation9], 8
      %81 = vst [vmem:[%s80] sm:$0xff] %v79
    $region25: #{tpu_custom_call.1} parent=1 // pred_fallthru
      _
    // Predicated region
    $region26: #{tpu_custom_call.1} parent=1 // pred_check
      _
    $region27: #{tpu_custom_call.1} parent=1 // pred_check_branch
      %83 = sbr.rel (0) target = $region29
    $region28: #{tpu_custom_call.1} parent=1 // pred_region
      %s85 = ssub.s32 256, 256
      %86 = vsyncadd [#allocation6], %s85
      %s87 = sshll.u32 [#allocation9], 4
      %s88 = int_to_ptr.vmem [resolvable:$true] %s87
      %93 = dma.vmem_to_hbm [thread:$0]  %s88, 256, %s2, [#allocation6], 128, 128, 8
    $region29: #{tpu_custom_call.1} parent=1 // pred_fallthru
      _
    // Predicated region
    $region30: #{tpu_custom_call.1} parent=1 // pred_check
      _
    $region31: #{tpu_custom_call.1} parent=1 // pred_check_branch
      %95 = sbr.rel (0) target = $region33
    $region32: #{tpu_custom_call.1} parent=1 // pred_region
      %96 = dma.done [#allocation6], 256
    $region33: #{tpu_custom_call.1} parent=1 // pred_fallthru
      _
    %97 = vsyncpa [#allocation5], 1
    %98 = vsyncpa [#allocation8], 1
    %99 = vsyncpa [#allocation6], 1

</llo_original>
